<compile_context>
chip_gen: v6e
topology: v6e:2x2x1
jax: 0.10.0
libtpu: 0.0.40
codegen_flags: <defaults>
</compile_context>

<pallas_src>
import functools

import jax
import jax.numpy as jnp
from jax.experimental import pallas as pl
from jax.experimental.pallas import tpu as pltpu  # noqa: F401

SLAB_WIDTH = 128   # lanes of the packed activation slab [c0 | x | h0 | 1 | pad]
DEC_WIDTH = 128    # lanes of the padded decoder weight tile


def lstm_step_kernel(slab_ref, w_g_ref, w_dec_ref, out_ref, *, hidden_size):
    """One fused LSTM step.

    slab_ref : (B, 128)        [c0 | x | h0 | 1 | 0-pad]
    w_g_ref  : (128, 4H)       gate weights; rows aligned to the slab lanes, encoder
                               + gate biases folded in, i/f/o columns pre-scaled by 0.5
    w_dec_ref: (40, 128)       rows [0,H)=w_dec, row H=b_dec, rest zero; cols >= O zero
    out_ref  : (B, 4H)         packed [h1 | c1 | decoder_out | zero pad]
    """
    B = slab_ref.shape[0]
    H = hidden_size
    G = 4 * H

    slab = slab_ref[...]
    c0 = slab[:, 0:H]                       # prefix lane slice of the slab

    # Single fused gate matmul: encoder, input/hidden gate weights and gate biases
    # all live in w_g (bias row is driven by the slab's constant-1 lane; the c0 and
    # pad lanes hit zero rows).
    gates = jnp.dot(slab, w_g_ref[...], preferred_element_type=jnp.float32)   # (B, 4H)

    # Single tanh pass over the whole gate tile.  The i/f/o columns of w_g were
    # pre-scaled by 0.5, so sigmoid(z) = 0.5*tanh(0.5*z) + 0.5 == 0.5*tanh(gates)+0.5.
    t = jnp.tanh(gates)
    lane = jax.lax.broadcasted_iota(jnp.int32, (B, G), dimension=1)
    is_g_gate = (lane >= 2 * H) & (lane < 3 * H)
    act = jnp.where(is_g_gate, t, 0.5 * t + 0.5)

    i_g = act[:, 0 * H:1 * H]
    f_g = act[:, 1 * H:2 * H]
    g_g = act[:, 2 * H:3 * H]
    o_g = act[:, 3 * H:4 * H]

    c1 = f_g * c0 + i_g * g_g
    h1 = o_g * jnp.tanh(c1)

    # Decoder: Linear(hidden -> output) with b_dec folded in as an extra weight row
    # driven by a ones lane appended to h1.
    K = w_dec_ref.shape[0]
    h1_ext = jnp.concatenate(
        [h1, jnp.ones((B, 1), jnp.float32), jnp.zeros((B, K - H - 1), jnp.float32)],
        axis=-1)                                                           # (B, K)
    dec_full = jnp.dot(h1_ext, w_dec_ref[...],
                       preferred_element_type=jnp.float32)                 # (B, 128)

    # Lane-dense packed output: [h1 | c1 | dec | zeros] in a single (B, 4H) store.
    out_ref[...] = jnp.concatenate([h1, c1, dec_full[:, :G - 2 * H]], axis=-1)


def pack_params(raw_params, input_size, hidden_size, output_size):
    """Fold encoder, gate biases, sigmoid pre-scale and decoder bias into two
    lane-dense weight slabs.  Done once outside the kernel."""
    (w_enc, b_enc, w_ih, b_ih, w_hh, b_hh, w_dec, b_dec) = raw_params
    I, H, O = input_size, hidden_size, output_size
    G = 4 * H
    # Lane-layout assumptions (see review correctness concerns).
    assert I + 2 * H + 1 <= SLAB_WIDTH, "slab [c0|x|h0|1|pad] must fit 128 lanes"
    assert 2 * H + O <= G, "packed output [h1|c1|out|pad] must fit 4H lanes"
    assert 2 * H <= DEC_WIDTH and O <= DEC_WIDTH

    # Fold the encoder Linear into the input->gate weights.
    w_xg = w_enc @ w_ih                                   # (I, 4H)
    b_g = (b_enc @ w_ih + b_ih + b_hh)[0]                 # (4H,)

    # Bake the 0.5 sigmoid pre-scale into the i/f/o columns (bias row included).
    col = jnp.arange(G)
    is_g_gate = (col >= 2 * H) & (col < 3 * H)
    scale = jnp.where(is_g_gate, 1.0, 0.5).astype(jnp.float32)

    # Gate weight slab, rows aligned to the input slab lanes [c0 | x | h0 | 1 | pad].
    w_g = jnp.zeros((SLAB_WIDTH, G), jnp.float32)
    w_g = w_g.at[H:H + I, :].set(w_xg)                    # x rows
    w_g = w_g.at[H + I:H + I + H, :].set(w_hh)            # h0 rows
    w_g = w_g.at[H + I + H, :].set(b_g)                   # bias row (ones lane)
    w_g = w_g * scale[None, :]

    # Decoder weights padded to a full 128-lane tile; b_dec as an extra row.
    K = ((H + 1 + 7) // 8) * 8                            # sublane-multiple rows
    w_dec_ext = jnp.zeros((K, DEC_WIDTH), jnp.float32)
    w_dec_ext = w_dec_ext.at[:H, :O].set(w_dec)
    w_dec_ext = w_dec_ext.at[H, :O].set(b_dec[0])
    return (w_g, w_dec_ext)


def rnn_forward(x, hidden, packed_params, *, hidden_size, output_size):
    """Mirrors RNN.forward(input, hidden) for model='lstm', n_layers=1.

    x      : (B, input_size) float32
    hidden : tuple (h0, c0), each (1, B, hidden_size)
    returns: (output (B, output_size), (h1, c1) each (1, B, hidden_size))
    """
    w_g, w_dec_ext = packed_params
    h0, c0 = hidden
    B, I = x.shape
    H, O = hidden_size, output_size
    G = 4 * H

    h0_2d = h0.reshape(B, H).astype(jnp.float32)
    c0_2d = c0.reshape(B, H).astype(jnp.float32)

    # Single lane-padded activation slab [c0 | x | h0 | 1 | 0-pad] -> (B, 128).
    pad_w = SLAB_WIDTH - (2 * H + I + 1)
    slab = jnp.concatenate(
        [c0_2d, x.astype(jnp.float32), h0_2d,
         jnp.ones((B, 1), jnp.float32), jnp.zeros((B, pad_w), jnp.float32)],
        axis=-1)

    kernel = functools.partial(lstm_step_kernel, hidden_size=H)
    full = lambda shape: pl.BlockSpec(shape, lambda: (0,) * len(shape))

    packed_out = pl.pallas_call(
        kernel,
        out_shape=jax.ShapeDtypeStruct((B, G), jnp.float32),
        grid=(),
        in_specs=[full(slab.shape), full(w_g.shape), full(w_dec_ext.shape)],
        out_specs=full((B, G)),
    )(slab, w_g, w_dec_ext)

    h1 = packed_out[:, 0:H]
    c1 = packed_out[:, H:2 * H]
    out = packed_out[:, 2 * H:2 * H + O]
    return out, (h1.reshape(1, B, H), c1.reshape(1, B, H))


def init_params(key, input_size, hidden_size, output_size):
    """Deterministic param init (uniform, PyTorch-like ranges).  Weights stored
    transposed relative to PyTorch so math is x @ W."""
    ks = jax.random.split(key, 8)

    def u(k, shape, bound):
        return jax.random.uniform(k, shape, jnp.float32, -bound, bound)

    be = 1.0 / jnp.sqrt(input_size)
    bh = 1.0 / jnp.sqrt(hidden_size)
    w_enc = u(ks[0], (input_size, hidden_size), be)
    b_enc = u(ks[1], (1, hidden_size), be)
    w_ih = u(ks[2], (hidden_size, 4 * hidden_size), bh)
    b_ih = u(ks[3], (1, 4 * hidden_size), bh)
    w_hh = u(ks[4], (hidden_size, 4 * hidden_size), bh)
    b_hh = u(ks[5], (1, 4 * hidden_size), bh)
    w_dec = u(ks[6], (hidden_size, output_size), bh)
    b_dec = u(ks[7], (1, output_size), bh)
    return (w_enc, b_enc, w_ih, b_ih, w_hh, b_hh, w_dec, b_dec)


def rnn_forward_ref(x, hidden, raw_params):
    """Pure-JAX reference (unfused, PyTorch-style) for the correctness check."""
    (w_enc, b_enc, w_ih, b_ih, w_hh, b_hh, w_dec, b_dec) = raw_params
    h0, c0 = hidden
    B = x.shape[0]
    H = w_enc.shape[1]
    h0 = h0.reshape(B, H)
    c0 = c0.reshape(B, H)
    enc = x @ w_enc + b_enc
    gates = enc @ w_ih + b_ih + h0 @ w_hh + b_hh
    i = jax.nn.sigmoid(gates[:, 0 * H:1 * H])
    f = jax.nn.sigmoid(gates[:, 1 * H:2 * H])
    g = jnp.tanh(gates[:, 2 * H:3 * H])
    o = jax.nn.sigmoid(gates[:, 3 * H:4 * H])
    c1 = f * c0 + i * g
    h1 = o * jnp.tanh(c1)
    out = h1 @ w_dec + b_dec
    return out, (h1.reshape(1, B, H), c1.reshape(1, B, H))


if __name__ == "__main__":
    input_size, hidden_size, output_size = 16, 32, 8
    batch = 8  # multiple of 8 -> full vreg sublanes

    key = jax.random.PRNGKey(0)
    kp, kx, kh, kc = jax.random.split(key, 4)
    raw_params = init_params(kp, input_size, hidden_size, output_size)
    packed_params = pack_params(raw_params, input_size, hidden_size, output_size)

    x = jax.random.normal(kx, (batch, input_size), jnp.float32)
    # init_hidden(batch) gives zeros; use random h0/c0 here to exercise all gate paths.
    h0 = 0.1 * jax.random.normal(kh, (1, batch, hidden_size), jnp.float32)
    c0 = 0.1 * jax.random.normal(kc, (1, batch, hidden_size), jnp.float32)

    out, (h1, c1) = rnn_forward(x, (h0, c0), packed_params,
                                hidden_size=hidden_size, output_size=output_size)
    jax.block_until_ready((out, h1, c1))

    out_ref, (h1_ref, c1_ref) = rnn_forward_ref(x, (h0, c0), raw_params)
    assert jnp.allclose(out, out_ref, atol=5e-5), "decoder output mismatch"
    assert jnp.allclose(h1, h1_ref, atol=5e-5), "hidden state mismatch"
    assert jnp.allclose(c1, c1_ref, atol=5e-5), "cell state mismatch"

    print("KERNEL_OK")
</pallas_src>

<mosaic_0001>
module attributes {stable_mosaic.version = 11 : i64} {
  func.func @lstm_step_kernel(%arg0: memref<8x128xf32, #tpu.memory_space<vmem>>, %arg1: memref<128x128xf32, #tpu.memory_space<vmem>>, %arg2: memref<40x128xf32, #tpu.memory_space<vmem>>, %arg3: memref<8x128xf32, #tpu.memory_space<vmem>>) attributes {dimension_semantics = [], scalar_prefetch = 0 : i64, scratch_operands = 0 : i64, tpu.core_type = #tpu.core_type<tc>} {
    %c0 = arith.constant 0 : index
    %c0_0 = arith.constant 0 : index
    %0 = vector.load %arg0[%c0, %c0_0] : memref<8x128xf32, #tpu.memory_space<vmem>>, vector<8x128xf32>
    %1 = vector.extract_strided_slice %0 {offsets = [0, 0], sizes = [8, 32], strides = [1, 1]} : vector<8x128xf32> to vector<8x32xf32>
    %c0_1 = arith.constant 0 : index
    %c0_2 = arith.constant 0 : index
    %2 = vector.load %arg1[%c0_1, %c0_2] : memref<128x128xf32, #tpu.memory_space<vmem>>, vector<128x128xf32>
    %cst = arith.constant dense<0.000000e+00> : vector<8x128xf32>
    %3 = tpu.matmul %0, %2, %cst {dimension_numbers = #tpu.dot_dimension_numbers<[1], [0], [0], [1], [0, 0, 1, 1], [], []>} : vector<8x128xf32>, vector<128x128xf32>, vector<8x128xf32> -> vector<8x128xf32>
    %4 = math.tanh %3 : vector<8x128xf32>
    %5 = tpu.iota {dimensions = array<i32: 1>} : vector<8x128xi32>
    %c64_i32 = arith.constant 64 : i32
    %6 = vector.broadcast %c64_i32 : i32 to vector<8x128xi32>
    %7 = arith.cmpi sge, %5, %6 : vector<8x128xi32>
    %c96_i32 = arith.constant 96 : i32
    %8 = vector.broadcast %c96_i32 : i32 to vector<8x128xi32>
    %9 = arith.cmpi slt, %5, %8 : vector<8x128xi32>
    %10 = arith.andi %7, %9 : vector<8x128xi1>
    %cst_3 = arith.constant 5.000000e-01 : f32
    %11 = vector.broadcast %cst_3 : f32 to vector<8x128xf32>
    %12 = arith.mulf %11, %4 : vector<8x128xf32>
    %cst_4 = arith.constant 5.000000e-01 : f32
    %13 = vector.broadcast %cst_4 : f32 to vector<8x128xf32>
    %14 = arith.addf %12, %13 : vector<8x128xf32>
    %15 = arith.select %10, %4, %14 : vector<8x128xi1>, vector<8x128xf32>
    %16 = vector.extract_strided_slice %15 {offsets = [0, 0], sizes = [8, 32], strides = [1, 1]} : vector<8x128xf32> to vector<8x32xf32>
    %17 = vector.extract_strided_slice %15 {offsets = [0, 32], sizes = [8, 32], strides = [1, 1]} : vector<8x128xf32> to vector<8x32xf32>
    %18 = vector.extract_strided_slice %15 {offsets = [0, 64], sizes = [8, 32], strides = [1, 1]} : vector<8x128xf32> to vector<8x32xf32>
    %19 = vector.extract_strided_slice %15 {offsets = [0, 96], sizes = [8, 32], strides = [1, 1]} : vector<8x128xf32> to vector<8x32xf32>
    %20 = arith.mulf %17, %1 : vector<8x32xf32>
    %21 = arith.mulf %16, %18 : vector<8x32xf32>
    %22 = arith.addf %20, %21 : vector<8x32xf32>
    %23 = math.tanh %22 : vector<8x32xf32>
    %24 = arith.mulf %19, %23 : vector<8x32xf32>
    %cst_5 = arith.constant 1.000000e+00 : f32
    %25 = vector.broadcast %cst_5 : f32 to vector<8x1xf32>
    %cst_6 = arith.constant 0.000000e+00 : f32
    %26 = vector.broadcast %cst_6 : f32 to vector<8x7xf32>
    %27 = tpu.concatenate %24, %25, %26 in 1 : vector<8x32xf32>, vector<8x1xf32>, vector<8x7xf32> -> vector<8x40xf32>
    %c0_7 = arith.constant 0 : index
    %c0_8 = arith.constant 0 : index
    %28 = vector.load %arg2[%c0_7, %c0_8] : memref<40x128xf32, #tpu.memory_space<vmem>>, vector<40x128xf32>
    %cst_9 = arith.constant dense<0.000000e+00> : vector<8x128xf32>
    %29 = tpu.matmul %27, %28, %cst_9 {dimension_numbers = #tpu.dot_dimension_numbers<[1], [0], [0], [1], [0, 0, 1, 1], [], []>} : vector<8x40xf32>, vector<40x128xf32>, vector<8x128xf32> -> vector<8x128xf32>
    %30 = vector.extract_strided_slice %29 {offsets = [0, 0], sizes = [8, 64], strides = [1, 1]} : vector<8x128xf32> to vector<8x64xf32>
    %31 = tpu.concatenate %24, %22, %30 in 1 : vector<8x32xf32>, vector<8x32xf32>, vector<8x64xf32> -> vector<8x128xf32>
    %c0_10 = arith.constant 0 : index
    %c0_11 = arith.constant 0 : index
    %32 = vector.load %arg3[%c0_10, %c0_11] : memref<8x128xf32, #tpu.memory_space<vmem>>, vector<8x128xf32>
    tpu.vector_store %arg3[%c0_10, %c0_11], %31 {strides = array<i32>} : memref<8x128xf32, #tpu.memory_space<vmem>>, vector<8x128xf32>,
    return
  }
}

</mosaic_0001>

<llo_original>
// kernel: tpu_custom_call.1
$region0: #{tpu_custom_call.1}
  #allocation0 [shape = 'u32[]', space=smem, size = 0x4, offset = 0x4, fixed_abs, tag = 'smem constant byte address 0x4 - core index']
  #allocation1 [shape = 'u32[144,128]{1,0:T(1,128)}', space=vmem, size = 0x12000, scoped, tag = 'internal scratch']
  %s0 = inlined_call_operand.hbm [shape: f32[8,128], index: 0, kind: input, shape index: {}]
  %s1 = inlined_call_operand.hbm [shape: f32[128,128], index: 1, kind: input, shape index: {}]
  %s2 = inlined_call_operand.hbm [shape: f32[40,128], index: 2, kind: input, shape index: {}]
  %s3 = inlined_call_operand.hbm [shape: f32[8,128], index: 3, kind: output, shape index: {}]
  %s4 = sld [smem:[#allocation0]]
  $region34: #{tpu_custom_call.1} parent=0
    _
  %s6 = ssub.s32 1, %s4
  %s7 = scalar_select 0, %s6, %s4
  $region1: #{tpu_custom_call.1} parent=0
    #allocation2 [shape = 'u8[4096]{0}', space=vmem, size = 0x1000, scoped, tag = 'input window, operand 0, single buffered']
    #allocation3 [shape = 's32[1]{0}', space=sflag, size = 0x4, scoped, tag = 'scoped memory for tpu_custom_call.1']
    #allocation4 [shape = 's32[1]{0}', space=sflag, size = 0x4, scoped, tag = 'scoped memory for tpu_custom_call.1']
    #allocation5 [shape = 'u8[65536]{0}', space=vmem, size = 0x10000, scoped, tag = 'input window, operand 1, single buffered']
    #allocation6 [shape = 's32[1]{0}', space=sflag, size = 0x4, scoped, tag = 'scoped memory for tpu_custom_call.1']
    #allocation7 [shape = 'u8[20480]{0}', space=vmem, size = 0x5000, scoped, tag = 'input window, operand 2, single buffered']
    #allocation8 [shape = 'u8[4096]{0}', space=vmem, size = 0x1000, scoped, tag = 'output window, operand 0, single buffered']
    %8 = vsyncpa [#allocation3], 0
    %9 = vsyncpa [#allocation6], 0
    %10 = vsyncpa [#allocation4], 0
    // Predicated region
    $region2: #{tpu_custom_call.1} parent=1 // pred_check
      _
    $region3: #{tpu_custom_call.1} parent=1 // pred_check_branch
      %12 = sbr.rel (0) target = $region5
    $region4: #{tpu_custom_call.1} parent=1 // pred_region
      %s14 = ssub.s32 128, 128
      %15 = vsyncadd [#allocation3], %s14
      %s17 = sshll.u32 [#allocation2], 4
      %s18 = int_to_ptr.vmem [resolvable:$true] %s17
      %20 = dma.hbm_to_vmem [thread:$0]  %s0, 128, %s18, [#allocation3]
    $region5: #{tpu_custom_call.1} parent=1 // pred_fallthru
      _
    // Predicated region
    $region6: #{tpu_custom_call.1} parent=1 // pred_check
      _
    $region7: #{tpu_custom_call.1} parent=1 // pred_check_branch
      %22 = sbr.rel (0) target = $region9
    $region8: #{tpu_custom_call.1} parent=1 // pred_region
      %s24 = ssub.s32 2048, 2048
      %25 = vsyncadd [#allocation6], %s24
      %s26 = sshll.u32 [#allocation5], 4
      %s27 = int_to_ptr.vmem [resolvable:$true] %s26
      %32 = dma.hbm_to_vmem [thread:$0]  %s1, 2048, %s27, [#allocation6], 128, 128, 8
    $region9: #{tpu_custom_call.1} parent=1 // pred_fallthru
      _
    // Predicated region
    $region10: #{tpu_custom_call.1} parent=1 // pred_check
      _
    $region11: #{tpu_custom_call.1} parent=1 // pred_check_branch
      %34 = sbr.rel (0) target = $region13
    $region12: #{tpu_custom_call.1} parent=1 // pred_region
      %s36 = ssub.s32 640, 640
      %37 = vsyncadd [#allocation6], %s36
      %s38 = sshll.u32 [#allocation7], 4
      %s39 = int_to_ptr.vmem [resolvable:$true] %s38
      %44 = dma.hbm_to_vmem [thread:$0]  %s2, 640, %s39, [#allocation6], 128, 128, 8
    $region13: #{tpu_custom_call.1} parent=1 // pred_fallthru
      _
    // Predicated region
    $region14: #{tpu_custom_call.1} parent=1 // pred_check
      _
    $region15: #{tpu_custom_call.1} parent=1 // pred_check_branch
      %46 = sbr.rel (0) target = $region17
    $region16: #{tpu_custom_call.1} parent=1 // pred_region
      %47 = dma.done [#allocation3], 128
    $region17: #{tpu_custom_call.1} parent=1 // pred_fallthru
      _
    // Predicated region
    $region18: #{tpu_custom_call.1} parent=1 // pred_check
      _
    $region19: #{tpu_custom_call.1} parent=1 // pred_check_branch
      %49 = sbr.rel (0) target = $region21
    $region20: #{tpu_custom_call.1} parent=1 // pred_region
      %50 = dma.done [#allocation6], 2048
    $region21: #{tpu_custom_call.1} parent=1 // pred_fallthru
      _
    // Predicated region
    $region22: #{tpu_custom_call.1} parent=1 // pred_check
      _
    $region23: #{tpu_custom_call.1} parent=1 // pred_check_branch
      %52 = sbr.rel (0) target = $region25
    $region24: #{tpu_custom_call.1} parent=1 // pred_region
      %53 = dma.done [#allocation6], 640
    $region25: #{tpu_custom_call.1} parent=1 // pred_fallthru
      _
    %v54 = vld [vmem:[#allocation2] sm:$0xff]
    %v55 = vld [vmem:[#allocation5] sm:$0xff]
    %v56 = vld [vmem:[#allocation5 + $0x8] sm:$0xff]
    %v57 = vld [vmem:[#allocation5 + $0x10] sm:$0xff]
    %v58 = vld [vmem:[#allocation5 + $0x18] sm:$0xff]
    %v59 = vld [vmem:[#allocation5 + $0x20] sm:$0xff]
    %v60 = vld [vmem:[#allocation5 + $0x28] sm:$0xff]
    %v61 = vld [vmem:[#allocation5 + $0x30] sm:$0xff]
    %v62 = vld [vmem:[#allocation5 + $0x38] sm:$0xff]
    %v63 = vld [vmem:[#allocation5 + $0x40] sm:$0xff]
    %v64 = vld [vmem:[#allocation5 + $0x48] sm:$0xff]
    %v65 = vld [vmem:[#allocation5 + $0x50] sm:$0xff]
    %v66 = vld [vmem:[#allocation5 + $0x58] sm:$0xff]
    %v67 = vld [vmem:[#allocation5 + $0x60] sm:$0xff]
    %v68 = vld [vmem:[#allocation5 + $0x68] sm:$0xff]
    %v69 = vld [vmem:[#allocation5 + $0x70] sm:$0xff]
    %v70 = vld [vmem:[#allocation5 + $0x78] sm:$0xff]
    %71 = vmatprep.subr.mxu0 0.0
    %72 = vmatpush1.msra.mxu0 %v70
    %73 = vmatprep.subr.mxu0 0.0
    %74 = vmatpush1.msra.mxu0 %v69
    %75 = vmatprep.subr.mxu0 0.0
    %76 = vmatpush1.msra.mxu0 %v68
    %77 = vmatprep.subr.mxu0 0.0
    %78 = vmatpush1.msra.mxu0 %v67
    %79 = vmatprep.subr.mxu0 0.0
    %80 = vmatpush1.msra.mxu0 %v66
    %81 = vmatprep.subr.mxu0 0.0
    %82 = vmatpush1.msra.mxu0 %v65
    %83 = vmatprep.subr.mxu0 0.0
    %84 = vmatpush1.msra.mxu0 %v64
    %85 = vmatprep.subr.mxu0 0.0
    %86 = vmatpush1.msra.mxu0 %v63
    %87 = vmatprep.subr.mxu0 0.0
    %88 = vmatpush1.msra.mxu0 %v62
    %89 = vmatprep.subr.mxu0 0.0
    %90 = vmatpush1.msra.mxu0 %v61
    %91 = vmatprep.subr.mxu0 0.0
    %92 = vmatpush1.msra.mxu0 %v60
    %93 = vmatprep.subr.mxu0 0.0
    %94 = vmatpush1.msra.mxu0 %v59
    %95 = vmatprep.subr.mxu0 0.0
    %96 = vmatpush1.msra.mxu0 %v58
    %97 = vmatprep.subr.mxu0 0.0
    %98 = vmatpush1.msra.mxu0 %v57
    %99 = vmatprep.subr.mxu0 0.0
    %100 = vmatpush1.msra.mxu0 %v56
    %101 = vmatprep.subr.mxu0 0.0
    %102 = vmatpush1.msra.mxu0 %v55
    %103 = vmatprep.subr.mxu0 0.0
    %104 = vmatpush2.msra.mxu0 0.0
    %105 = vmatprep.subr.mxu0 0.0
    %106 = vmatpush2.msra.mxu0 0.0
    %107 = vmatprep.subr.mxu0 0.0
    %108 = vmatpush2.msra.mxu0 0.0
    %109 = vmatprep.subr.mxu0 0.0
    %110 = vmatpush2.msra.mxu0 0.0
    %111 = vmatprep.subr.mxu0 0.0
    %112 = vmatpush2.msra.mxu0 0.0
    %113 = vmatprep.subr.mxu0 0.0
    %114 = vmatpush2.msra.mxu0 0.0
    %115 = vmatprep.subr.mxu0 0.0
    %116 = vmatpush2.msra.mxu0 0.0
    %117 = vmatprep.subr.mxu0 0.0
    %118 = vmatpush2.msra.mxu0 0.0
    %119 = vmatprep.subr.mxu0 0.0
    %120 = vmatpush2.msra.mxu0 0.0
    %121 = vmatprep.subr.mxu0 0.0
    %122 = vmatpush2.msra.mxu0 0.0
    %123 = vmatprep.subr.mxu0 0.0
    %124 = vmatpush2.msra.mxu0 0.0
    %125 = vmatprep.subr.mxu0 0.0
    %126 = vmatpush2.msra.mxu0 0.0
    %127 = vmatprep.subr.mxu0 0.0
    %128 = vmatpush2.msra.mxu0 0.0
    %129 = vmatprep.subr.mxu0 0.0
    %130 = vmatpush2.msra.mxu0 0.0
    %131 = vmatprep.subr.mxu0 0.0
    %132 = vmatpush2.msra.mxu0 0.0
    %133 = vmatprep.subr.mxu0 0.0
    %134 = vmatpush2.msra.mxu0 0.0
    %135 = vmatprep.mubr.f32.mxu0 0.0
    %136 = vmatmul.mubr.f32.gmra.mxu0 %v54
    %v137 = vpop.f32.mrf.mxu0
    %v138 = vadd.f32 0.0, %v137
    %v139 = vpop.f32.mrf.mxu0
    %140 = vdwg.mxu0
    %v141 = vtanh.pop %v138
    %v142 = vlaneseq
    %v143 = vand.u32 %v142, 127
    %vm144 = vcmp.ge.s32.totalorder %v143, 64
    %vm145 = vcmp.lt.s32.totalorder %v143, 96
    %vm146 = vmand %vm144, %vm145
    %v147 = vmul.f32 %v141, 0.5
    %v148 = vadd.f32 %v147, 0.5
    %v149 = vsel %vm146, %v141, %v148
    %151 = vrot.lane.b32.xlu0 %v54, 32
    %v152 = vpop.permute.xlu0 %151
    %v154 = vmul.f32 %v149, %v152
    %156 = vrot.lane.b32.xlu0 %v149, 64
    %v157 = vpop.permute.xlu0 %156
    %v159 = vmul.f32 %v149, %v157
    %161 = vrot.lane.b32.xlu0 %v159, 32
    %v162 = vpop.permute.xlu0 %161
    %v164 = vadd.f32 %v154, %v162
    %v165 = vtanh.pop %v164
    %167 = vrot.lane.b32.xlu0 %v165, 64
    %v168 = vpop.permute.xlu0 %167
    %v170 = vmul.f32 %v149, %v168
    %172 = vrot.lane.b32.xlu0 %v170, 32
    %v173 = vpop.permute.xlu0 %172
    %vm175 = vcmask 261120
    %v176 = vsel %vm175, %v173, 1.0
    %vm177 = vcmask 269312
    %v178 = vsel %vm177, %v176, 0.0
    %v179 = vld [vmem:[#allocation7] sm:$0xff]
    %v180 = vld [vmem:[#allocation7 + $0x8] sm:$0xff]
    %v181 = vld [vmem:[#allocation7 + $0x10] sm:$0xff]
    %v182 = vld [vmem:[#allocation7 + $0x18] sm:$0xff]
    %v183 = vld [vmem:[#allocation7 + $0x20] sm:$0xff]
    %vm184 = vcmask 326656
    %v186 = vsel %vm184, %v178, 0
    %188 = vmatprep.subr.mxu0 0.0
    %189 = vmatpush1.msra.mxu0 0.0
    %190 = vmatprep.subr.mxu0 0.0
    %191 = vmatpush1.msra.mxu0 0.0
    %192 = vmatprep.subr.mxu0 0.0
    %193 = vmatpush1.msra.mxu0 0.0
    %194 = vmatprep.subr.mxu0 0.0
    %195 = vmatpush1.msra.mxu0 0.0
    %196 = vmatprep.subr.mxu0 0.0
    %197 = vmatpush1.msra.mxu0 0.0
    %198 = vmatprep.subr.mxu0 0.0
    %199 = vmatpush1.msra.mxu0 0.0
    %200 = vmatprep.subr.mxu0 0.0
    %201 = vmatpush1.msra.mxu0 0.0
    %202 = vmatprep.subr.mxu0 0.0
    %203 = vmatpush1.msra.mxu0 0.0
    %204 = vmatprep.subr.mxu0 0.0
    %205 = vmatpush1.msra.mxu0 0.0
    %206 = vmatprep.subr.mxu0 0.0
    %207 = vmatpush1.msra.mxu0 0.0
    %208 = vmatprep.subr.mxu0 0.0
    %209 = vmatpush1.msra.mxu0 0.0
    %210 = vmatprep.subr.mxu0 0.0
    %211 = vmatpush1.msra.mxu0 %v183
    %212 = vmatprep.subr.mxu0 0.0
    %213 = vmatpush1.msra.mxu0 %v182
    %214 = vmatprep.subr.mxu0 0.0
    %215 = vmatpush1.msra.mxu0 %v181
    %216 = vmatprep.subr.mxu0 0.0
    %217 = vmatpush1.msra.mxu0 %v180
    %218 = vmatprep.subr.mxu0 0.0
    %219 = vmatpush1.msra.mxu0 %v179
    %220 = vmatprep.subr.mxu0 0.0
    %221 = vmatpush2.msra.mxu0 0.0
    %222 = vmatprep.subr.mxu0 0.0
    %223 = vmatpush2.msra.mxu0 0.0
    %224 = vmatprep.subr.mxu0 0.0
    %225 = vmatpush2.msra.mxu0 0.0
    %226 = vmatprep.subr.mxu0 0.0
    %227 = vmatpush2.msra.mxu0 0.0
    %228 = vmatprep.subr.mxu0 0.0
    %229 = vmatpush2.msra.mxu0 0.0
    %230 = vmatprep.subr.mxu0 0.0
    %231 = vmatpush2.msra.mxu0 0.0
    %232 = vmatprep.subr.mxu0 0.0
    %233 = vmatpush2.msra.mxu0 0.0
    %234 = vmatprep.subr.mxu0 0.0
    %235 = vmatpush2.msra.mxu0 0.0
    %236 = vmatprep.subr.mxu0 0.0
    %237 = vmatpush2.msra.mxu0 0.0
    %238 = vmatprep.subr.mxu0 0.0
    %239 = vmatpush2.msra.mxu0 0.0
    %240 = vmatprep.subr.mxu0 0.0
    %241 = vmatpush2.msra.mxu0 0.0
    %242 = vmatprep.subr.mxu0 0.0
    %243 = vmatpush2.msra.mxu0 0.0
    %244 = vmatprep.subr.mxu0 0.0
    %245 = vmatpush2.msra.mxu0 0.0
    %246 = vmatprep.subr.mxu0 0.0
    %247 = vmatpush2.msra.mxu0 0.0
    %248 = vmatprep.subr.mxu0 0.0
    %249 = vmatpush2.msra.mxu0 0.0
    %250 = vmatprep.subr.mxu0 0.0
    %251 = vmatpush2.msra.mxu0 0.0
    %252 = vmatprep.mubr.f32.mxu0 0.0
    %253 = vmatmul.mubr.f32.gmra.mxu0 %v186
    %v254 = vpop.f32.mrf.mxu0
    %v255 = vadd.f32 0.0, %v254
    %v256 = vpop.f32.mrf.mxu0
    %257 = vdwg.mxu0
    %259 = vrot.lane.b32.xlu0 %v255, 64
    %v260 = vpop.permute.xlu0 %259
    %v262 = vsel %vm175, %v173, %v164
    %vm263 = vcmask 523264
    %v264 = vsel %vm263, %v262, %v260
    %265 = vst [vmem:[#allocation8] sm:$0xff] %v264
    // Predicated region
    $region26: #{tpu_custom_call.1} parent=1 // pred_check
      _
    $region27: #{tpu_custom_call.1} parent=1 // pred_check_branch
      %267 = sbr.rel (0) target = $region29
    $region28: #{tpu_custom_call.1} parent=1 // pred_region
      %s269 = ssub.s32 128, 128
      %270 = vsyncadd [#allocation4], %s269
      %s272 = sshll.u32 [#allocation8], 4
      %s273 = int_to_ptr.vmem [resolvable:$true] %s272
      %275 = dma.vmem_to_hbm [thread:$0]  %s273, 128, %s3, [#allocation4]
    $region29: #{tpu_custom_call.1} parent=1 // pred_fallthru
      _
    // Predicated region
    $region30: #{tpu_custom_call.1} parent=1 // pred_check
      _
    $region31: #{tpu_custom_call.1} parent=1 // pred_check_branch
      %277 = sbr.rel (0) target = $region33
    $region32: #{tpu_custom_call.1} parent=1 // pred_region
      %278 = dma.done [#allocation4], 128
    $region33: #{tpu_custom_call.1} parent=1 // pred_fallthru
      _
    %279 = vsyncpa [#allocation3], 1
    %280 = vsyncpa [#allocation6], 1
    %281 = vsyncpa [#allocation4], 1

</llo_original>
